<compile_context>
chip_gen: v5e
topology: v5e:2x2
jax: 0.10.0
libtpu: 0.0.40
codegen_flags: <defaults>
</compile_context>

<pallas_src>
import math

import jax
import jax.numpy as jnp
from jax import lax
from jax.experimental import pallas as pl
from jax.experimental.pallas import tpu as pltpu


def _orthogonal_init(key, in_dim, out_dim, std):
    """Deterministic orthogonal init (same semantics as torch.nn.init.orthogonal_),
    returned already transposed to (in_dim, out_dim)."""
    rows, cols = out_dim, in_dim  # torch weight shape is (out, in)
    n = max(rows, cols)
    a = jax.random.normal(key, (n, n), dtype=jnp.float32)
    q, r = jnp.linalg.qr(a)
    q = q * jnp.sign(jnp.diag(r))[None, :]
    w = q[:rows, :cols] * std          # (out, in)
    return jnp.asarray(w.T)            # (in, out)


def _round_up(n, m):
    return ((n + m - 1) // m) * m


def _make_policy_kernel(num_hidden, action_dim):
    """Pallas kernel for `num_hidden` hidden (Linear+ReLU) layers followed by the
    fused mu/std head (single matmul, single packed (tile_b, 2A) output)."""

    def kernel(*refs):
        # refs layout:
        #   x_ref,
        #   (w_ref, b_ref) * num_hidden,
        #   w_head_ref, b_head_ref,
        #   out_ref   (tile_b, 2*action_dim): [:, :A] = mu, [:, A:] = std
        x_ref = refs[0]
        hidden_refs = refs[1 : 1 + 2 * num_hidden]
        w_head_ref, b_head_ref = refs[1 + 2 * num_hidden : 3 + 2 * num_hidden]
        out_ref = refs[3 + 2 * num_hidden]

        compute_dtype = x_ref.dtype  # bf16 or f32; MXU accumulates in f32 either way.

        h = x_ref[...]
        for li in range(num_hidden):
            w = hidden_refs[2 * li][...]
            b = hidden_refs[2 * li + 1][...]
            h = jnp.dot(h, w, preferred_element_type=jnp.float32) + b
            h = jnp.maximum(h, 0.0).astype(compute_dtype)  # ReLU, keep MXU input dtype

        # Fused head: z[:, :A] is the mu pre-activation, z[:, A:] the std one.
        z = jnp.dot(h, w_head_ref[...], preferred_element_type=jnp.float32)
        z = z + b_head_ref[...]

        # mu = 1.0 * tanh(z_mu)
        mu = jnp.tanh(z)
        # std = softplus(z_std) + 1e-6, single-path stable softplus.
        softplus = jnp.maximum(z, 0.0) + jnp.log1p(jnp.exp(-jnp.abs(z)))
        std = softplus + 1e-6

        # Pack: first A lanes take tanh, last A lanes take softplus. Mask is a
        # (1, 2A) row broadcast in the select (no per-tile full iota).
        col = lax.broadcasted_iota(jnp.int32, (1, 2 * action_dim), 1)
        out = jnp.where(col < action_dim, mu, std)
        out_ref[...] = out.astype(out_ref.dtype)

        # TODO(synk): the PyTorch forward prints a warning if NaNs appear in mu/std;
        # host-side printing/branching has no clean in-kernel equivalent and is omitted.

    return kernel


def _choose_tiling(batch, batch_tile):
    """Pick (tile_b, padded_batch, grid) such that:
       * tile_b is a multiple of 8 (sublane) and <= batch_tile-ish,
       * the grid has >= 2 steps when batch > 8 rows (v7x: 2 TensorCores),
       * tail padding is minimized (tile divides batch as snugly as possible)."""
    min_tiles_for_cap = pl.cdiv(batch, batch_tile)
    want_two = min(2, pl.cdiv(batch, 8))  # 2 if batch > 8, else 1
    n_tiles = max(min_tiles_for_cap, want_two)
    tile_b = _round_up(pl.cdiv(batch, n_tiles), 8)
    padded_batch = _round_up(batch, tile_b)
    grid = padded_batch // tile_b
    return tile_b, padded_batch, grid


def policy_net_continuous_forward(x, params, *, batch_tile=2048, use_bf16_inputs=False):
    """params: dict with 'hidden' = [(W, b), ...], 'mu' = (W, b), 'std' = (W, b).
    Weights are (in, out); biases are (1, out). Returns (mu, std) as float32."""
    num_hidden = len(params["hidden"])
    batch, state_dim = x.shape
    action_dim = params["mu"][0].shape[1]

    compute_dtype = jnp.bfloat16 if use_bf16_inputs else jnp.float32

    # Fuse the two head projections into one (in, 2*A) matmul.
    w_head = jnp.concatenate([params["mu"][0], params["std"][0]], axis=1).astype(compute_dtype)
    b_head = jnp.concatenate([params["mu"][1], params["std"][1]], axis=1)  # f32
    hidden = [(w.astype(compute_dtype), b) for (w, b) in params["hidden"]]

    tile_b, padded_batch, grid = _choose_tiling(batch, batch_tile)
    x_c = x.astype(compute_dtype)
    x_p = x_c if padded_batch == batch else jnp.pad(x_c, ((0, padded_batch - batch), (0, 0)))

    kernel = _make_policy_kernel(num_hidden, action_dim)

    # Operands + specs. Weights/biases are full blocks pinned at block (0, 0) so
    # they stay VMEM-resident across grid steps; only x / out move with the grid.
    operands = [x_p]
    in_specs = [pl.BlockSpec((tile_b, state_dim), lambda i: (i, 0))]
    for w, b in hidden:
        operands += [w, b]
        in_specs += [
            pl.BlockSpec(w.shape, lambda i: (0, 0)),
            pl.BlockSpec(b.shape, lambda i: (0, 0)),
        ]
    operands += [w_head, b_head]
    in_specs += [
        pl.BlockSpec(w_head.shape, lambda i: (0, 0)),
        pl.BlockSpec(b_head.shape, lambda i: (0, 0)),
    ]
    out_spec = pl.BlockSpec((tile_b, 2 * action_dim), lambda i: (i, 0))

    # Advisory cost estimate so XLA can overlap this small call with neighbors.
    flops = 0
    in_dim = state_dim
    for w, _ in hidden:
        flops += 2 * padded_batch * in_dim * w.shape[1]
        in_dim = w.shape[1]
    flops += 2 * padded_batch * in_dim * 2 * action_dim
    transcendentals = padded_batch * 3 * 2 * action_dim  # tanh + exp + log1p per packed lane
    out_bytes = padded_batch * 2 * action_dim * 4
    weight_bytes = sum(int(w.nbytes) + int(b.nbytes) for w, b in hidden)
    weight_bytes += int(w_head.nbytes) + int(b_head.nbytes)
    bytes_accessed = int(x_p.nbytes) + out_bytes + weight_bytes
    cost = pl.CostEstimate(
        flops=int(flops),
        transcendentals=int(transcendentals),
        bytes_accessed=int(bytes_accessed),
    )

    out = pl.pallas_call(
        kernel,
        out_shape=jax.ShapeDtypeStruct((padded_batch, 2 * action_dim), jnp.float32),
        grid=(grid,),
        in_specs=in_specs,
        out_specs=out_spec,
        compiler_params=pltpu.CompilerParams(dimension_semantics=("parallel",)),
        cost_estimate=cost,
    )(*operands)

    mu = out[:batch, :action_dim]
    std = out[:batch, action_dim:]
    return mu, std


def init_params(key, state_dim, action_dim, net_arch):
    """Deterministic parameter init mirroring _layer_init (orthogonal std=sqrt(2), bias=0)."""
    std = math.sqrt(2.0)
    params = {"hidden": []}
    in_dim = state_dim
    for hidden_dim in net_arch:
        key, sub = jax.random.split(key)
        w = _orthogonal_init(sub, in_dim, hidden_dim, std)
        b = jnp.zeros((1, hidden_dim), dtype=jnp.float32)
        params["hidden"].append((w, b))
        in_dim = hidden_dim
    key, kmu, kstd = jax.random.split(key, 3)
    params["mu"] = (
        _orthogonal_init(kmu, in_dim, action_dim, std),
        jnp.zeros((1, action_dim), dtype=jnp.float32),
    )
    params["std"] = (
        _orthogonal_init(kstd, in_dim, action_dim, std),
        jnp.zeros((1, action_dim), dtype=jnp.float32),
    )
    return params


def _reference_forward(x, params):
    """Pure-JAX f32 reference for sanity checking."""
    h = x
    for w, b in params["hidden"]:
        h = jnp.maximum(h @ w + b, 0.0)
    mu = jnp.tanh(h @ params["mu"][0] + params["mu"][1])
    std = jax.nn.softplus(h @ params["std"][0] + params["std"][1]) + 1e-6
    return mu, std


if __name__ == "__main__":
    key = jax.random.PRNGKey(0)

    batch = 8
    state_dim = 16
    action_dim = 4
    net_arch = [32, 32]

    key, kx, kp = jax.random.split(key, 3)
    x = jax.random.normal(kx, (batch, state_dim), dtype=jnp.float32)
    params = init_params(kp, state_dim, action_dim, net_arch)

    # Small batch, f32 path (single grid step).
    mu, std = policy_net_continuous_forward(x, params)
    jax.block_until_ready((mu, std))
    mu_ref, std_ref = _reference_forward(x, params)
    assert mu.shape == (batch, action_dim) and std.shape == (batch, action_dim)
    assert jnp.allclose(mu, mu_ref, atol=1e-5, rtol=1e-5)
    assert jnp.allclose(std, std_ref, atol=1e-5, rtol=1e-5)

    # Larger batch: exercises >=2 grid steps (v7x TC sharding) + snug-tile padding path.
    key, kx2 = jax.random.split(key)
    x_big = jax.random.normal(kx2, (300, state_dim), dtype=jnp.float32)
    mu_b, std_b = policy_net_continuous_forward(x_big, params)
    jax.block_until_ready((mu_b, std_b))
    mu_br, std_br = _reference_forward(x_big, params)
    assert jnp.allclose(mu_b, mu_br, atol=1e-5, rtol=1e-5)
    assert jnp.allclose(std_b, std_br, atol=1e-5, rtol=1e-5)

    # Optional bf16-input fast path (halved x HBM traffic); looser tolerance vs f32 ref.
    mu_h, std_h = policy_net_continuous_forward(x_big, params, use_bf16_inputs=True)
    jax.block_until_ready((mu_h, std_h))
    assert jnp.allclose(mu_h, mu_br, atol=5e-2, rtol=5e-2)
    assert jnp.allclose(std_h, std_br, atol=5e-2, rtol=5e-2)

    print("KERNEL_OK")
</pallas_src>

<mosaic_0001>
module attributes {stable_mosaic.version = 11 : i64} {
  func.func @kernel(%arg0: i32, %arg1: memref<8x16xf32, #tpu.memory_space<vmem>>, %arg2: memref<16x32xf32, #tpu.memory_space<vmem>>, %arg3: memref<1x32xf32, #tpu.memory_space<vmem>>, %arg4: memref<32x32xf32, #tpu.memory_space<vmem>>, %arg5: memref<1x32xf32, #tpu.memory_space<vmem>>, %arg6: memref<32x8xf32, #tpu.memory_space<vmem>>, %arg7: memref<1x8xf32, #tpu.memory_space<vmem>>, %arg8: memref<8x8xf32, #tpu.memory_space<vmem>>) attributes {dimension_semantics = [#tpu.dimension_semantics<parallel>], iteration_bounds = array<i64: 1>, scalar_prefetch = 0 : i64, scratch_operands = 0 : i64, tpu.core_type = #tpu.core_type<tc>, window_params = [{transform_indices = @transform_0, window_bounds = array<i64: 8, 16>}, {pipeline_mode = #tpu.pipeline_mode<synchronous>, transform_indices = @transform_1, window_bounds = array<i64: 16, 32>}, {pipeline_mode = #tpu.pipeline_mode<synchronous>, transform_indices = @transform_2, window_bounds = array<i64: 1, 32>}, {pipeline_mode = #tpu.pipeline_mode<synchronous>, transform_indices = @transform_3, window_bounds = array<i64: 32, 32>}, {pipeline_mode = #tpu.pipeline_mode<synchronous>, transform_indices = @transform_4, window_bounds = array<i64: 1, 32>}, {pipeline_mode = #tpu.pipeline_mode<synchronous>, transform_indices = @transform_5, window_bounds = array<i64: 32, 8>}, {pipeline_mode = #tpu.pipeline_mode<synchronous>, transform_indices = @transform_6, window_bounds = array<i64: 1, 8>}, {transform_indices = @transform_7, window_bounds = array<i64: 8, 8>}]} {
    %c0 = arith.constant 0 : index
    %c0_0 = arith.constant 0 : index
    %0 = vector.load %arg1[%c0, %c0_0] : memref<8x16xf32, #tpu.memory_space<vmem>>, vector<8x16xf32>
    %c0_1 = arith.constant 0 : index
    %c0_2 = arith.constant 0 : index
    %1 = vector.load %arg2[%c0_1, %c0_2] : memref<16x32xf32, #tpu.memory_space<vmem>>, vector<16x32xf32>
    %c0_3 = arith.constant 0 : index
    %c0_4 = arith.constant 0 : index
    %2 = vector.load %arg3[%c0_3, %c0_4] : memref<1x32xf32, #tpu.memory_space<vmem>>, vector<1x32xf32>
    %cst = arith.constant dense<0.000000e+00> : vector<8x32xf32>
    %3 = tpu.matmul %0, %1, %cst {dimension_numbers = #tpu.dot_dimension_numbers<[1], [0], [0], [1], [0, 0, 1, 1], [], []>} : vector<8x16xf32>, vector<16x32xf32>, vector<8x32xf32> -> vector<8x32xf32>
    %4 = vector.broadcast %2 : vector<1x32xf32> to vector<8x32xf32>
    %5 = arith.addf %3, %4 : vector<8x32xf32>
    %cst_5 = arith.constant 0.000000e+00 : f32
    %6 = vector.broadcast %cst_5 : f32 to vector<8x32xf32>
    %7 = arith.maximumf %5, %6 : vector<8x32xf32>
    %c0_6 = arith.constant 0 : index
    %c0_7 = arith.constant 0 : index
    %8 = vector.load %arg4[%c0_6, %c0_7] : memref<32x32xf32, #tpu.memory_space<vmem>>, vector<32x32xf32>
    %c0_8 = arith.constant 0 : index
    %c0_9 = arith.constant 0 : index
    %9 = vector.load %arg5[%c0_8, %c0_9] : memref<1x32xf32, #tpu.memory_space<vmem>>, vector<1x32xf32>
    %cst_10 = arith.constant dense<0.000000e+00> : vector<8x32xf32>
    %10 = tpu.matmul %7, %8, %cst_10 {dimension_numbers = #tpu.dot_dimension_numbers<[1], [0], [0], [1], [0, 0, 1, 1], [], []>} : vector<8x32xf32>, vector<32x32xf32>, vector<8x32xf32> -> vector<8x32xf32>
    %11 = vector.broadcast %9 : vector<1x32xf32> to vector<8x32xf32>
    %12 = arith.addf %10, %11 : vector<8x32xf32>
    %cst_11 = arith.constant 0.000000e+00 : f32
    %13 = vector.broadcast %cst_11 : f32 to vector<8x32xf32>
    %14 = arith.maximumf %12, %13 : vector<8x32xf32>
    %c0_12 = arith.constant 0 : index
    %c0_13 = arith.constant 0 : index
    %15 = vector.load %arg6[%c0_12, %c0_13] : memref<32x8xf32, #tpu.memory_space<vmem>>, vector<32x8xf32>
    %cst_14 = arith.constant dense<0.000000e+00> : vector<8x8xf32>
    %16 = tpu.matmul %14, %15, %cst_14 {dimension_numbers = #tpu.dot_dimension_numbers<[1], [0], [0], [1], [0, 0, 1, 1], [], []>} : vector<8x32xf32>, vector<32x8xf32>, vector<8x8xf32> -> vector<8x8xf32>
    %c0_15 = arith.constant 0 : index
    %c0_16 = arith.constant 0 : index
    %17 = vector.load %arg7[%c0_15, %c0_16] : memref<1x8xf32, #tpu.memory_space<vmem>>, vector<1x8xf32>
    %18 = vector.broadcast %17 : vector<1x8xf32> to vector<8x8xf32>
    %19 = arith.addf %16, %18 : vector<8x8xf32>
    %20 = math.tanh %19 : vector<8x8xf32>
    %cst_17 = arith.constant 0.000000e+00 : f32
    %21 = vector.broadcast %cst_17 : f32 to vector<8x8xf32>
    %22 = arith.maximumf %19, %21 : vector<8x8xf32>
    %23 = math.absf %19 : vector<8x8xf32>
    %cst_18 = arith.constant 0.000000e+00 : f32
    %24 = vector.broadcast %cst_18 : f32 to vector<8x8xf32>
    %25 = arith.subf %24, %23 : vector<8x8xf32>
    %26 = math.exp %25 : vector<8x8xf32>
    %27 = math.log1p %26 : vector<8x8xf32>
    %28 = arith.addf %22, %27 : vector<8x8xf32>
    %cst_19 = arith.constant 9.99999997E-7 : f32
    %29 = vector.broadcast %cst_19 : f32 to vector<8x8xf32>
    %30 = arith.addf %28, %29 : vector<8x8xf32>
    %31 = tpu.iota {dimensions = array<i32: 1>} : vector<1x8xi32>
    %c4_i32 = arith.constant 4 : i32
    %32 = vector.broadcast %c4_i32 : i32 to vector<1x8xi32>
    %33 = arith.cmpi slt, %31, %32 : vector<1x8xi32>
    %34 = vector.shape_cast %33 : vector<1x8xi1> to vector<1x8xi1>
    %35 = vector.broadcast %34 : vector<1x8xi1> to vector<8x8xi1>
    %36 = arith.select %35, %20, %30 : vector<8x8xi1>, vector<8x8xf32>
    %c0_20 = arith.constant 0 : index
    %c0_21 = arith.constant 0 : index
    %37 = vector.load %arg8[%c0_20, %c0_21] : memref<8x8xf32, #tpu.memory_space<vmem>>, vector<8x8xf32>
    tpu.vector_store %arg8[%c0_20, %c0_21], %36 {strides = array<i32>} : memref<8x8xf32, #tpu.memory_space<vmem>>, vector<8x8xf32>,
    return
  }
  func.func @transform_0(%arg0: i32) -> (i32, i32) {
    %c0_i32 = arith.constant 0 : i32
    %c0_i32_0 = arith.constant 0 : i32
    return %arg0, %c0_i32 : i32, i32
  }
  func.func @transform_1(%arg0: i32) -> (i32, i32) {
    %c0_i32 = arith.constant 0 : i32
    %c0_i32_0 = arith.constant 0 : i32
    %c0_i32_1 = arith.constant 0 : i32
    return %c0_i32, %c0_i32_0 : i32, i32
  }
  func.func @transform_2(%arg0: i32) -> (i32, i32) {
    %c0_i32 = arith.constant 0 : i32
    %c0_i32_0 = arith.constant 0 : i32
    %c0_i32_1 = arith.constant 0 : i32
    return %c0_i32, %c0_i32_0 : i32, i32
  }
  func.func @transform_3(%arg0: i32) -> (i32, i32) {
    %c0_i32 = arith.constant 0 : i32
    %c0_i32_0 = arith.constant 0 : i32
    %c0_i32_1 = arith.constant 0 : i32
    return %c0_i32, %c0_i32_0 : i32, i32
  }
  func.func @transform_4(%arg0: i32) -> (i32, i32) {
    %c0_i32 = arith.constant 0 : i32
    %c0_i32_0 = arith.constant 0 : i32
    %c0_i32_1 = arith.constant 0 : i32
    return %c0_i32, %c0_i32_0 : i32, i32
  }
  func.func @transform_5(%arg0: i32) -> (i32, i32) {
    %c0_i32 = arith.constant 0 : i32
    %c0_i32_0 = arith.constant 0 : i32
    %c0_i32_1 = arith.constant 0 : i32
    return %c0_i32, %c0_i32_0 : i32, i32
  }
  func.func @transform_6(%arg0: i32) -> (i32, i32) {
    %c0_i32 = arith.constant 0 : i32
    %c0_i32_0 = arith.constant 0 : i32
    %c0_i32_1 = arith.constant 0 : i32
    return %c0_i32, %c0_i32_0 : i32, i32
  }
  func.func @transform_7(%arg0: i32) -> (i32, i32) {
    %c0_i32 = arith.constant 0 : i32
    %c0_i32_0 = arith.constant 0 : i32
    return %arg0, %c0_i32 : i32, i32
  }
}

</mosaic_0001>

<llo_original>
// kernel: tpu_custom_call.1
$region0: #{tpu_custom_call.1}
  #allocation0 [shape = 'u32[]', space=smem, size = 0x4, offset = 0x4, fixed_abs, tag = 'smem constant byte address 0x4 - core index']
  #allocation1 [shape = 'u32[72,128]{1,0:T(1,128)}', space=vmem, size = 0x9000, scoped, tag = 'internal scratch']
  %s0 = inlined_call_operand.vmem [shape: f32[8,16], index: 0, kind: input, shape index: {}]
  %s1 = inlined_call_operand.hbm [shape: f32[16,32], index: 1, kind: input, shape index: {}]
  %s2 = inlined_call_operand.vmem [shape: f32[1,32], index: 2, kind: input, shape index: {}]
  %s3 = inlined_call_operand.vmem [shape: f32[32,32], index: 3, kind: input, shape index: {}]
  %s4 = inlined_call_operand.vmem [shape: f32[1,32], index: 4, kind: input, shape index: {}]
  %s5 = inlined_call_operand.vmem [shape: f32[32,8], index: 5, kind: input, shape index: {}]
  %s6 = inlined_call_operand.vmem [shape: f32[1,8], index: 6, kind: input, shape index: {}]
  %s7 = inlined_call_operand.hbm [shape: f32[8,8], index: 7, kind: output, shape index: {}]
  %s8 = sld [smem:[#allocation0]]
  $region42: #{tpu_custom_call.1} parent=0
    _
  %s10 = ssub.s32 1, %s8
  %s11 = scalar_select 0, %s10, %s8
  $region1: #{tpu_custom_call.1} parent=0
    #allocation2 [shape = 'u8[8192]{0}', space=vmem, size = 0x2000, scoped, tag = 'input window, operand 1, single buffered']
    #allocation3 [shape = 's32[1]{0}', space=sflag, size = 0x4, scoped, tag = 'scoped memory for tpu_custom_call.1']
    #allocation4 [shape = 's32[1]{0}', space=sflag, size = 0x4, scoped, tag = 'scoped memory for tpu_custom_call.1']
    #allocation5 [shape = 'u8[4096]{0}', space=vmem, size = 0x1000, scoped, tag = 'output window, operand 0, single buffered']
    %12 = vsyncpa [#allocation3], 0
    %13 = vsyncpa [#allocation4], 0
    // Predicated region
    $region2: #{tpu_custom_call.1} parent=1 // pred_check
      _
    $region3: #{tpu_custom_call.1} parent=1 // pred_check_branch
      %15 = sbr.rel (0) target = $region5
    $region4: #{tpu_custom_call.1} parent=1 // pred_region
      _
    $region5: #{tpu_custom_call.1} parent=1 // pred_fallthru
      _
    // Predicated region
    $region6: #{tpu_custom_call.1} parent=1 // pred_check
      _
    $region7: #{tpu_custom_call.1} parent=1 // pred_check_branch
      %17 = sbr.rel (0) target = $region9
    $region8: #{tpu_custom_call.1} parent=1 // pred_region
      %19 = vsyncadd [#allocation3], 0
      %s20 = sshll.u32 %s1, 4
      %s21 = int_to_ptr.hbm [resolvable:$true] %s20
      %s22 = sshll.u32 [#allocation2], 4
      %s23 = int_to_ptr.vmem [resolvable:$true] %s22
      %28 = dma.hbm_to_vmem [thread:$0]  %s21, 256, %s23, [#allocation3], 128, 128, 8
    $region9: #{tpu_custom_call.1} parent=1 // pred_fallthru
      _
    // Predicated region
    $region10: #{tpu_custom_call.1} parent=1 // pred_check
      _
    $region11: #{tpu_custom_call.1} parent=1 // pred_check_branch
      %30 = sbr.rel (0) target = $region13
    $region12: #{tpu_custom_call.1} parent=1 // pred_region
      _
    $region13: #{tpu_custom_call.1} parent=1 // pred_fallthru
      _
    // Predicated region
    $region14: #{tpu_custom_call.1} parent=1 // pred_check
      _
    $region15: #{tpu_custom_call.1} parent=1 // pred_check_branch
      %32 = sbr.rel (0) target = $region17
    $region16: #{tpu_custom_call.1} parent=1 // pred_region
      _
    $region17: #{tpu_custom_call.1} parent=1 // pred_fallthru
      _
    // Predicated region
    $region18: #{tpu_custom_call.1} parent=1 // pred_check
      _
    $region19: #{tpu_custom_call.1} parent=1 // pred_check_branch
      %34 = sbr.rel (0) target = $region21
    $region20: #{tpu_custom_call.1} parent=1 // pred_region
      _
    $region21: #{tpu_custom_call.1} parent=1 // pred_fallthru
      _
    // Predicated region
    $region22: #{tpu_custom_call.1} parent=1 // pred_check
      _
    $region23: #{tpu_custom_call.1} parent=1 // pred_check_branch
      %36 = sbr.rel (0) target = $region25
    $region24: #{tpu_custom_call.1} parent=1 // pred_region
      _
    $region25: #{tpu_custom_call.1} parent=1 // pred_fallthru
      _
    // Predicated region
    $region26: #{tpu_custom_call.1} parent=1 // pred_check
      _
    $region27: #{tpu_custom_call.1} parent=1 // pred_check_branch
      %38 = sbr.rel (0) target = $region29
    $region28: #{tpu_custom_call.1} parent=1 // pred_region
      _
    $region29: #{tpu_custom_call.1} parent=1 // pred_fallthru
      _
    // Predicated region
    $region30: #{tpu_custom_call.1} parent=1 // pred_check
      _
    $region31: #{tpu_custom_call.1} parent=1 // pred_check_branch
      %40 = sbr.rel (0) target = $region33
    $region32: #{tpu_custom_call.1} parent=1 // pred_region
      %42 = dma.done [#allocation3], 256
    $region33: #{tpu_custom_call.1} parent=1 // pred_fallthru
      _
    %v43 = vld [vmem:[%s0] sm:$0xff]
    %v44 = vld [vmem:[#allocation2] sm:$0xff]
    %v45 = vld [vmem:[#allocation2 + $0x8] sm:$0xff]
    %v46 = vld [vmem:[%s2] sm:$0x1]
    %v48 = vperm.slane %v46, 0
    %vm50 = vcmask 130048
    %v52 = vsel %vm50, %v43, 0
    %54 = vmatpush.msra.mxu0 0.0
    %55 = vmatpush.msra.mxu0 0.0
    %56 = vmatpush.msra.mxu0 0.0
    %57 = vmatpush.msra.mxu0 0.0
    %58 = vmatpush.msra.mxu0 0.0
    %59 = vmatpush.msra.mxu0 0.0
    %60 = vmatpush.msra.mxu0 0.0
    %61 = vmatpush.msra.mxu0 0.0
    %62 = vmatpush.msra.mxu0 0.0
    %63 = vmatpush.msra.mxu0 0.0
    %64 = vmatpush.msra.mxu0 0.0
    %65 = vmatpush.msra.mxu0 0.0
    %66 = vmatpush.msra.mxu0 0.0
    %67 = vmatpush.msra.mxu0 0.0
    %68 = vmatpush.msra.mxu0 %v45
    %69 = vmatpush.msra.mxu0 %v44
    %70 = vmatmul.f32.gmra.mxu0 %v52
    %v71 = vpop.f32.mrf.mxu0
    %v72 = vadd.f32 %v48, %v71
    %73 = vdwg.mxu0
    %v74 = vmax.f32 %v72, 0.0
    %v75 = vld [vmem:[%s3] sm:$0xff]
    %v76 = vld [vmem:[%s3 + $0x8] sm:$0xff]
    %v77 = vld [vmem:[%s3 + $0x10] sm:$0xff]
    %v78 = vld [vmem:[%s3 + $0x18] sm:$0xff]
    %v79 = vld [vmem:[%s4] sm:$0x1]
    %v81 = vperm.slane %v79, 0
    %vm83 = vcmask 261120
    %v85 = vsel %vm83, %v74, 0
    %87 = vmatpush.msra.mxu0 0.0
    %88 = vmatpush.msra.mxu0 0.0
    %89 = vmatpush.msra.mxu0 0.0
    %90 = vmatpush.msra.mxu0 0.0
    %91 = vmatpush.msra.mxu0 0.0
    %92 = vmatpush.msra.mxu0 0.0
    %93 = vmatpush.msra.mxu0 0.0
    %94 = vmatpush.msra.mxu0 0.0
    %95 = vmatpush.msra.mxu0 0.0
    %96 = vmatpush.msra.mxu0 0.0
    %97 = vmatpush.msra.mxu0 0.0
    %98 = vmatpush.msra.mxu0 0.0
    %99 = vmatpush.msra.mxu0 %v78
    %100 = vmatpush.msra.mxu0 %v77
    %101 = vmatpush.msra.mxu0 %v76
    %102 = vmatpush.msra.mxu0 %v75
    %103 = vmatmul.f32.gmra.mxu0 %v85
    %v104 = vpop.f32.mrf.mxu0
    %v105 = vadd.f32 %v81, %v104
    %106 = vdwg.mxu0
    %v107 = vmax.f32 %v105, 0.0
    %v108 = vld [vmem:[%s5] sm:$0xff]
    %v109 = vld [vmem:[%s5 + $0x8] sm:$0xff]
    %v110 = vld [vmem:[%s5 + $0x10] sm:$0xff]
    %v111 = vld [vmem:[%s5 + $0x18] sm:$0xff]
    %v112 = vld [vmem:[%s6] sm:$0x1]
    %v114 = vperm.slane %v112, 0
    %v117 = vsel %vm83, %v107, 0
    %119 = vmatpush.msra.mxu0 0.0
    %120 = vmatpush.msra.mxu0 0.0
    %121 = vmatpush.msra.mxu0 0.0
    %122 = vmatpush.msra.mxu0 0.0
    %123 = vmatpush.msra.mxu0 0.0
    %124 = vmatpush.msra.mxu0 0.0
    %125 = vmatpush.msra.mxu0 0.0
    %126 = vmatpush.msra.mxu0 0.0
    %127 = vmatpush.msra.mxu0 0.0
    %128 = vmatpush.msra.mxu0 0.0
    %129 = vmatpush.msra.mxu0 0.0
    %130 = vmatpush.msra.mxu0 0.0
    %131 = vmatpush.msra.mxu0 %v111
    %132 = vmatpush.msra.mxu0 %v110
    %133 = vmatpush.msra.mxu0 %v109
    %134 = vmatpush.msra.mxu0 %v108
    %135 = vmatmul.f32.gmra.mxu0 %v117
    %v136 = vpop.f32.mrf.mxu0
    %v137 = vadd.f32 %v114, %v136
    %138 = vdwg.mxu0
    %v139 = vtanh.pop %v137
    %v140 = vmax.f32 %v137, 0.0
    %v141 = vand.u32 2147483647, %v137
    %v142 = vsub.f32 0.0, %v141
    %v143 = vmul.f32 %v142, 1.442695
    %v144 = vpow.pop %v143
    %v145 = vadd.f32 %v144, 1.0
    %v146 = vlog2.pop %v145
    %v147 = vmul.f32 %v146, 0.6931472
    %v148 = vmul.f32 -0.5, %v144
    %v149 = vadd.f32 %v148, 1.0
    %v150 = vmul.f32 %v149, %v144
    %v151 = vand.u32 2147483647, %v144
    %vm152 = vcmp.lt.f32.partialorder %v151, 0.0004427343
    %v153 = vsel %vm152, %v150, %v147
    %v154 = vadd.f32 %v140, %v153
    %v155 = vadd.f32 %v154, 1e-06
    %v156 = vlaneseq
    %v157 = vand.u32 %v156, 127
    %vm158 = vcmp.lt.s32.totalorder %v157, 4
    %v159 = vsel %vm158, 1, 0
    %vm160 = vcmp.eq.s32.totalorder %v159, 1
    %v161 = vsel %vm160, %v139, %v155
    %vm162 = vcmask 64512
    %163 = vst.msk [vmem:[#allocation5] sm:$0xff] %vm162, %v161
    // Predicated region
    $region34: #{tpu_custom_call.1} parent=1 // pred_check
      _
    $region35: #{tpu_custom_call.1} parent=1 // pred_check_branch
      %165 = sbr.rel (0) target = $region37
    $region36: #{tpu_custom_call.1} parent=1 // pred_region
      %167 = vsyncadd [#allocation4], 0
      %s169 = sshll.u32 [#allocation5], 4
      %s170 = int_to_ptr.vmem [resolvable:$true] %s169
      %s171 = sshll.u32 %s7, 4
      %s172 = int_to_ptr.hbm [resolvable:$true] %s171
      %174 = dma.vmem_to_hbm [thread:$0]  %s170, 128, %s172, [#allocation4]
    $region37: #{tpu_custom_call.1} parent=1 // pred_fallthru
      _
    // Predicated region
    $region38: #{tpu_custom_call.1} parent=1 // pred_check
      _
    $region39: #{tpu_custom_call.1} parent=1 // pred_check_branch
      %176 = sbr.rel (0) target = $region41
    $region40: #{tpu_custom_call.1} parent=1 // pred_region
      %178 = dma.done [#allocation4], 128
    $region41: #{tpu_custom_call.1} parent=1 // pred_fallthru
      _
    %179 = vsyncpa [#allocation3], 1
    %180 = vsyncpa [#allocation4], 1

</llo_original>
